<compile_context>
chip_gen: v7x
topology: tpu7x:2x2x1
jax: 0.10.0
libtpu: 0.0.40
codegen_flags: <defaults>
</compile_context>

<pallas_src>
import functools

import jax
import jax.numpy as jnp
from jax import lax
from jax.experimental import pallas as pl
from jax.experimental.pallas import tpu as pltpu


def _round_up(x: int, m: int) -> int:
    return ((x + m - 1) // m) * m


def _sublane_pack(dtype) -> int:
    # Sublane packing factor per element width (f32: 8, bf16: 16, int8/fp8: 32).
    return {4: 8, 2: 16, 1: 32}.get(jnp.dtype(dtype).itemsize, 8)


def _default_tiles():
    """Generation-specific (tm, tn, vmem_limit_bytes)."""
    try:
        kind = jax.devices()[0].device_kind.lower()
    except Exception:  # pragma: no cover - defensive
        kind = ""
    if "v7" in kind:
        return 512, 256, 56 * 1024 * 1024      # 64 MiB VMEM part
    if "v6" in kind:
        return 1024, 512, 100 * 1024 * 1024    # 128 MiB VMEM, needs ~670 F/B
    if "v5" in kind:
        return 512, 1024, 100 * 1024 * 1024    # 128 MiB VMEM, needs ~240 F/B
    return 512, 256, 56 * 1024 * 1024          # conservative default


def _mlp_kernel(x_ref, w13_ref, w2t_ref, o_ref, acc_ref, *, tn):
    # x_ref:   (tm, dim)      token tile             (same block across j)
    # w13_ref: (2*tn, dim)    interleaved [w1 tile; w3 tile]   (streams over j)
    # w2t_ref: (tn, dim)      w2^T hidden-slice                (streams over j)
    # o_ref:   (tm, dim)      output tile            (written on last j)
    # acc_ref: (tm, dim)      f32 accumulator scratch
    j = pl.program_id(1)

    @pl.when(j == 0)
    def _init():
        acc_ref[...] = jnp.zeros_like(acc_ref)

    x = x_ref[...]
    # (tm, dim) x (2*tn, dim)^T -> (tm, 2*tn).  Weights stay in PyTorch
    # [out, in] layout: the streamed block is a contiguous run of full rows
    # (contiguous DMA) and the MXU consumes the transposed weight push.
    h = lax.dot_general(x, w13_ref[...], (((1,), (1,)), ((), ())),
                        preferred_element_type=jnp.float32)
    h1 = h[:, :tn]
    h3 = h[:, tn:]
    # SiLU(h1) * h3 : VPU elementwise + EUP sigmoid, kept in f32.
    gated = (h1 * jax.nn.sigmoid(h1)) * h3

    # NN matmul: (tm, tn) x (tn, dim) -> (tm, dim).  w2 was relayouted once at
    # weight-prep time to [out_dim, dim], so this tile is also contiguous rows.
    acc_ref[...] += lax.dot_general(
        gated.astype(w2t_ref.dtype), w2t_ref[...],
        (((1,), (0,)), ((), ())), preferred_element_type=jnp.float32)

    @pl.when(j == pl.num_programs(1) - 1)
    def _finalize():
        o_ref[...] = acc_ref[...].astype(o_ref.dtype)


def prepare_mlp_weights(w1, w2, w3, *, tn=None):
    """One-time weight relayout / padding (do this at load time, not per call).

    w1, w3 : [out_dim, dim]   (PyTorch nn.Linear layout, no bias)
    w2     : [dim, out_dim]

    Returns (w13, w2_t, tn_eff):
      w13  : [2*h_pad, dim]  per-hidden-tile interleave [w1 tile_j ; w3 tile_j]
      w2_t : [h_pad, dim]    w2 transposed (hidden rows contiguous)
      tn_eff : hidden tile size actually used (pass to mlp_forward).
    """
    if tn is None:
        tn = _default_tiles()[1]
    out_dim, dim = w1.shape
    tn_eff = int(min(tn, _round_up(out_dim, 128)))   # lane-aligned h1/h3 split
    h_pad = _round_up(out_dim, tn_eff)
    if h_pad != out_dim:
        # Zero padding is exact for SwiGLU: silu(0) * 0 == 0.
        pad = h_pad - out_dim
        w1 = jnp.pad(w1, ((0, pad), (0, 0)))
        w3 = jnp.pad(w3, ((0, pad), (0, 0)))
        w2 = jnp.pad(w2, ((0, 0), (0, pad)))
    nj = h_pad // tn_eff
    w13 = jnp.concatenate(
        [w1.reshape(nj, tn_eff, dim), w3.reshape(nj, tn_eff, dim)], axis=1,
    ).reshape(2 * h_pad, dim)
    w2_t = jnp.transpose(w2)                          # [h_pad, dim]
    return w13, w2_t, tn_eff


@functools.partial(jax.jit, static_argnames=("tn", "tm", "vmem_limit_bytes"))
def mlp_forward(x, w13, w2_t, *, tn, tm=None, vmem_limit_bytes=None):
    """SwiGLU MLP forward using weights prepared by prepare_mlp_weights.

    x : [..., dim]
    """
    dim = x.shape[-1]
    h_pad = w2_t.shape[0]
    assert w13.shape == (2 * h_pad, dim) and w2_t.shape == (h_pad, dim)
    assert h_pad % tn == 0, "tn must be the tn_eff returned by prepare_mlp_weights"

    if tm is None or vmem_limit_bytes is None:
        d_tm, _, d_vmem = _default_tiles()
        tm = d_tm if tm is None else tm
        vmem_limit_bytes = d_vmem if vmem_limit_bytes is None else vmem_limit_bytes

    orig_shape = x.shape
    x2d = x.reshape(-1, dim)
    n = x2d.shape[0]

    # ---- token tiling: pad (never assert), aligned to dtype sublane packing --
    pack = _sublane_pack(x.dtype)
    tm_eff = int(min(tm, _round_up(n, pack)))
    n_pad = _round_up(n, tm_eff)
    if n_pad != n:
        x2d = jnp.pad(x2d, ((0, n_pad - n), (0, 0)))

    grid = (n_pad // tm_eff, h_pad // tn)   # (parallel tokens, arbitrary hidden)

    x_isz = jnp.dtype(x.dtype).itemsize
    w_isz = jnp.dtype(w13.dtype).itemsize
    cost = pl.CostEstimate(
        flops=6 * n_pad * dim * h_pad,
        transcendentals=n_pad * h_pad,
        # Weights are re-streamed once per token tile.
        bytes_accessed=(2 * n_pad * dim * x_isz
                        + grid[0] * 3 * h_pad * dim * w_isz),
    )

    out2d = pl.pallas_call(
        functools.partial(_mlp_kernel, tn=tn),
        out_shape=jax.ShapeDtypeStruct((n_pad, dim), x.dtype),
        grid_spec=pltpu.PrefetchScalarGridSpec(
            num_scalar_prefetch=0,
            grid=grid,
            in_specs=[
                pl.BlockSpec((tm_eff, dim), lambda i, j: (i, 0)),    # x tile
                pl.BlockSpec((2 * tn, dim), lambda i, j: (j, 0)),    # [w1;w3] tile
                pl.BlockSpec((tn, dim), lambda i, j: (j, 0)),        # w2^T tile
            ],
            out_specs=pl.BlockSpec((tm_eff, dim), lambda i, j: (i, 0)),
            scratch_shapes=[pltpu.VMEM((tm_eff, dim), jnp.float32)],
        ),
        compiler_params=pltpu.CompilerParams(
            dimension_semantics=("parallel", "arbitrary"),
            vmem_limit_bytes=vmem_limit_bytes,
        ),
        cost_estimate=cost,
    )(x2d, w13, w2_t)

    if n_pad != n:
        out2d = out2d[:n]
    return out2d.reshape(orig_shape)


def _reference(x, w1, w2, w3):
    h1 = x @ w1.T
    h3 = x @ w3.T
    return (h1 * jax.nn.sigmoid(h1) * h3) @ w2.T


if __name__ == "__main__":
    key = jax.random.PRNGKey(0)

    # ---- Test 1: small shapes consistent with MLP(dim, out_dim) --------------
    dim, out_dim, batch, seq = 32, 64, 2, 8
    kx, k1, k2, k3, key = jax.random.split(key, 5)
    x = jax.random.normal(kx, (batch, seq, dim), dtype=jnp.float32)
    # PyTorch nn.Linear stores weights as [out_features, in_features].
    w1 = jax.random.normal(k1, (out_dim, dim), dtype=jnp.float32) * 0.1
    w2 = jax.random.normal(k2, (dim, out_dim), dtype=jnp.float32) * 0.1
    w3 = jax.random.normal(k3, (out_dim, dim), dtype=jnp.float32) * 0.1

    w13, w2_t, tn_eff = prepare_mlp_weights(w1, w2, w3)
    y = jax.block_until_ready(mlp_forward(x, w13, w2_t, tn=tn_eff))
    y_ref = _reference(x, w1, w2, w3)
    assert y.shape == x.shape
    assert jnp.allclose(y, y_ref, atol=1e-5, rtol=1e-5), "test1 mismatch vs reference"

    # ---- Test 2: exercises multi-step hidden accumulation + token padding ----
    dim, out_dim, batch, seq = 128, 384, 2, 24
    kx, k1, k2, k3, key = jax.random.split(key, 5)
    x = jax.random.normal(kx, (batch, seq, dim), dtype=jnp.float32)
    w1 = jax.random.normal(k1, (out_dim, dim), dtype=jnp.float32) * 0.05
    w2 = jax.random.normal(k2, (dim, out_dim), dtype=jnp.float32) * 0.05
    w3 = jax.random.normal(k3, (out_dim, dim), dtype=jnp.float32) * 0.05

    w13, w2_t, tn_eff = prepare_mlp_weights(w1, w2, w3, tn=128)   # 3 hidden steps
    y = jax.block_until_ready(mlp_forward(x, w13, w2_t, tn=tn_eff, tm=32))
    y_ref = _reference(x, w1, w2, w3)
    assert y.shape == x.shape
    assert jnp.allclose(y, y_ref, atol=1e-4, rtol=1e-4), "test2 mismatch vs reference"

    print("KERNEL_OK")
</pallas_src>

<mosaic_0001>
module attributes {stable_mosaic.version = 11 : i64} {
  func.func @_mlp_kernel(%arg0: i32, %arg1: i32, %arg2: memref<16x32xf32, #tpu.memory_space<vmem>>, %arg3: memref<256x32xf32, #tpu.memory_space<vmem>>, %arg4: memref<128x32xf32, #tpu.memory_space<vmem>>, %arg5: memref<16x32xf32, #tpu.memory_space<vmem>>, %arg6: memref<16x32xf32, #tpu.memory_space<vmem>>) attributes {dimension_semantics = [#tpu.dimension_semantics<parallel>, #tpu.dimension_semantics<arbitrary>], iteration_bounds = array<i64: 1, 1>, scalar_prefetch = 0 : i64, scratch_operands = 1 : i64, tpu.core_type = #tpu.core_type<tc>, window_params = [{transform_indices = @transform_0, window_bounds = array<i64: 16, 32>}, {transform_indices = @transform_1, window_bounds = array<i64: 256, 32>}, {transform_indices = @transform_2, window_bounds = array<i64: 128, 32>}, {transform_indices = @transform_3, window_bounds = array<i64: 16, 32>}]} {
    %c0_i32 = arith.constant 0 : i32
    %0 = arith.cmpi eq, %arg1, %c0_i32 : i32
    %1 = arith.extui %0 : i1 to i32
    %c0_i32_0 = arith.constant 0 : i32
    %2 = arith.cmpi ne, %1, %c0_i32_0 : i32
    scf.if %2 {
      %cst_14 = arith.constant 0.000000e+00 : f32
      %23 = vector.broadcast %cst_14 : f32 to vector<16x32xf32>
      %c0_15 = arith.constant 0 : index
      %c0_16 = arith.constant 0 : index
      %24 = vector.load %arg6[%c0_15, %c0_16] : memref<16x32xf32, #tpu.memory_space<vmem>>, vector<16x32xf32>
      tpu.vector_store %arg6[%c0_15, %c0_16], %23 {strides = array<i32>} : memref<16x32xf32, #tpu.memory_space<vmem>>, vector<16x32xf32>,
    } else {
    }
    %c0 = arith.constant 0 : index
    %c0_1 = arith.constant 0 : index
    %3 = vector.load %arg2[%c0, %c0_1] : memref<16x32xf32, #tpu.memory_space<vmem>>, vector<16x32xf32>
    %c0_2 = arith.constant 0 : index
    %c0_3 = arith.constant 0 : index
    %4 = vector.load %arg3[%c0_2, %c0_3] : memref<256x32xf32, #tpu.memory_space<vmem>>, vector<256x32xf32>
    %cst = arith.constant dense<0.000000e+00> : vector<16x256xf32>
    %5 = tpu.matmul %3, %4, %cst {dimension_numbers = #tpu.dot_dimension_numbers<[1], [1], [0], [0], [0, 0, 1, 0], [], []>} : vector<16x32xf32>, vector<256x32xf32>, vector<16x256xf32> -> vector<16x256xf32>
    %6 = vector.extract_strided_slice %5 {offsets = [0, 0], sizes = [16, 128], strides = [1, 1]} : vector<16x256xf32> to vector<16x128xf32>
    %7 = vector.extract_strided_slice %5 {offsets = [0, 128], sizes = [16, 128], strides = [1, 1]} : vector<16x256xf32> to vector<16x128xf32>
    %8 = arith.negf %6 : vector<16x128xf32>
    %9 = math.exp %8 : vector<16x128xf32>
    %cst_4 = arith.constant 1.000000e+00 : f32
    %10 = vector.broadcast %cst_4 : f32 to vector<16x128xf32>
    %11 = arith.addf %10, %9 : vector<16x128xf32>
    %12 = arith.divf %10, %11 : vector<16x128xf32>
    %13 = arith.mulf %6, %12 : vector<16x128xf32>
    %14 = arith.mulf %13, %7 : vector<16x128xf32>
    %c0_5 = arith.constant 0 : index
    %c0_6 = arith.constant 0 : index
    %15 = vector.load %arg6[%c0_5, %c0_6] : memref<16x32xf32, #tpu.memory_space<vmem>>, vector<16x32xf32>
    %c0_7 = arith.constant 0 : index
    %c0_8 = arith.constant 0 : index
    %16 = vector.load %arg4[%c0_7, %c0_8] : memref<128x32xf32, #tpu.memory_space<vmem>>, vector<128x32xf32>
    %cst_9 = arith.constant dense<0.000000e+00> : vector<16x32xf32>
    %17 = tpu.matmul %14, %16, %cst_9 {dimension_numbers = #tpu.dot_dimension_numbers<[1], [0], [0], [1], [0, 0, 1, 1], [], []>} : vector<16x128xf32>, vector<128x32xf32>, vector<16x32xf32> -> vector<16x32xf32>
    %18 = arith.addf %15, %17 : vector<16x32xf32>
    %c0_10 = arith.constant 0 : index
    %c0_11 = arith.constant 0 : index
    %19 = vector.load %arg6[%c0_10, %c0_11] : memref<16x32xf32, #tpu.memory_space<vmem>>, vector<16x32xf32>
    tpu.vector_store %arg6[%c0_10, %c0_11], %18 {strides = array<i32>} : memref<16x32xf32, #tpu.memory_space<vmem>>, vector<16x32xf32>,
    %c0_i32_12 = arith.constant 0 : i32
    %20 = arith.cmpi eq, %arg1, %c0_i32_12 : i32
    %21 = arith.extui %20 : i1 to i32
    %c0_i32_13 = arith.constant 0 : i32
    %22 = arith.cmpi ne, %21, %c0_i32_13 : i32
    scf.if %22 {
      %c0_14 = arith.constant 0 : index
      %c0_15 = arith.constant 0 : index
      %23 = vector.load %arg6[%c0_14, %c0_15] : memref<16x32xf32, #tpu.memory_space<vmem>>, vector<16x32xf32>
      %c0_16 = arith.constant 0 : index
      %c0_17 = arith.constant 0 : index
      %24 = vector.load %arg5[%c0_16, %c0_17] : memref<16x32xf32, #tpu.memory_space<vmem>>, vector<16x32xf32>
      tpu.vector_store %arg5[%c0_16, %c0_17], %23 {strides = array<i32>} : memref<16x32xf32, #tpu.memory_space<vmem>>, vector<16x32xf32>,
    } else {
    }
    return
  }
  func.func @transform_0(%arg0: i32, %arg1: i32) -> (i32, i32) {
    %c0_i32 = arith.constant 0 : i32
    %c0_i32_0 = arith.constant 0 : i32
    return %arg0, %c0_i32 : i32, i32
  }
  func.func @transform_1(%arg0: i32, %arg1: i32) -> (i32, i32) {
    %c0_i32 = arith.constant 0 : i32
    %c0_i32_0 = arith.constant 0 : i32
    return %arg1, %c0_i32 : i32, i32
  }
  func.func @transform_2(%arg0: i32, %arg1: i32) -> (i32, i32) {
    %c0_i32 = arith.constant 0 : i32
    %c0_i32_0 = arith.constant 0 : i32
    return %arg1, %c0_i32 : i32, i32
  }
  func.func @transform_3(%arg0: i32, %arg1: i32) -> (i32, i32) {
    %c0_i32 = arith.constant 0 : i32
    %c0_i32_0 = arith.constant 0 : i32
    return %arg0, %c0_i32 : i32, i32
  }
}

</mosaic_0001>

<llo_original>
// kernel: mlp_forward.1
$region0: #{mlp_forward.1}
  #allocation0 [shape = 'u32[]', space=smem, size = 0x4, offset = 0x4, fixed_abs, tag = 'smem constant byte address 0x4 - core index']
  #allocation1 [shape = 'u32[144,128]{1,0:T(1,128)}', space=vmem, size = 0x12000, scoped, tag = 'internal scratch']
  #allocation2 [shape = 'f32[16,32]{1,0:T(8,128)}', space=vmem, size = 0x2000, scoped, tag = 'scratch operand']
  %s0 = inlined_call_operand.vmem [shape: f32[16,32], index: 0, kind: input, shape index: {}]
  %s1 = inlined_call_operand.vmem [shape: f32[256,32], index: 1, kind: input, shape index: {}]
  %s2 = inlined_call_operand.vmem [shape: f32[128,32], index: 2, kind: input, shape index: {}]
  %s3 = inlined_call_operand.hbm [shape: f32[16,32], index: 3, kind: output, shape index: {}]
  %s4 = sld [smem:[#allocation0]]
  $region30: #{mlp_forward.1} parent=0
    _
  %s6 = ssub.s32 1, %s4
  %s7 = scalar_select 0, %s6, %s4
  $region1: #{mlp_forward.1} parent=0
    #allocation3 [shape = 'u8[8192]{0}', space=vmem, size = 0x2000, scoped, tag = 'output window, operand 0, single buffered']
    #allocation4 [shape = 's32[1]{0}', space=sflag, size = 0x4, scoped, tag = 'scoped memory for mlp_forward.1']
    %8 = vsyncpa [#allocation4], 0
    // Predicated region
    $region2: #{mlp_forward.1} parent=1 // pred_check
      _
    $region3: #{mlp_forward.1} parent=1 // pred_check_branch
      %10 = sbr.rel (0) target = $region5
    $region4: #{mlp_forward.1} parent=1 // pred_region
      _
    $region5: #{mlp_forward.1} parent=1 // pred_fallthru
      _
    // Predicated region
    $region6: #{mlp_forward.1} parent=1 // pred_check
      _
    $region7: #{mlp_forward.1} parent=1 // pred_check_branch
      %12 = sbr.rel (0) target = $region9
    $region8: #{mlp_forward.1} parent=1 // pred_region
      _
    $region9: #{mlp_forward.1} parent=1 // pred_fallthru
      _
    // Predicated region
    $region10: #{mlp_forward.1} parent=1 // pred_check
      _
    $region11: #{mlp_forward.1} parent=1 // pred_check_branch
      %14 = sbr.rel (0) target = $region13
    $region12: #{mlp_forward.1} parent=1 // pred_region
      _
    $region13: #{mlp_forward.1} parent=1 // pred_fallthru
      _
    %p15 = scmp.eq.s32.totalorder 0, 0
    // Predicated region
    $region14: #{mlp_forward.1} parent=1 // pred_check
      %p16 = pneg %p15
    $region15: #{mlp_forward.1} parent=1 // pred_check_branch
      %18 = sbr.rel (%p16) target = $region17
    $region16: #{mlp_forward.1} parent=1 // pred_region
      %vm19 = vcmask 261120
      %20 = vst.msk [vmem:[#allocation2] sm:$0xff] %vm19, 0.0
      %21 = vst.msk [vmem:[#allocation2 + $0x8] sm:$0xff] %vm19, 0.0
    $region17: #{mlp_forward.1} parent=1 // pred_fallthru
      _
    %v22 = vld [vmem:[%s0] sm:$0xff]
    %v23 = vld [vmem:[%s0 + $0x8] sm:$0xff]
    %v24 = vld [vmem:[%s1] sm:$0xff]
    %v25 = vld [vmem:[%s1 + $0x8] sm:$0xff]
    %v26 = vld [vmem:[%s1 + $0x10] sm:$0xff]
    %v27 = vld [vmem:[%s1 + $0x18] sm:$0xff]
    %v28 = vld [vmem:[%s1 + $0x20] sm:$0xff]
    %v29 = vld [vmem:[%s1 + $0x28] sm:$0xff]
    %v30 = vld [vmem:[%s1 + $0x30] sm:$0xff]
    %v31 = vld [vmem:[%s1 + $0x38] sm:$0xff]
    %v32 = vld [vmem:[%s1 + $0x40] sm:$0xff]
    %v33 = vld [vmem:[%s1 + $0x48] sm:$0xff]
    %v34 = vld [vmem:[%s1 + $0x50] sm:$0xff]
    %v35 = vld [vmem:[%s1 + $0x58] sm:$0xff]
    %v36 = vld [vmem:[%s1 + $0x60] sm:$0xff]
    %v37 = vld [vmem:[%s1 + $0x68] sm:$0xff]
    %v38 = vld [vmem:[%s1 + $0x70] sm:$0xff]
    %v39 = vld [vmem:[%s1 + $0x78] sm:$0xff]
    %v40 = vld [vmem:[%s1 + $0x80] sm:$0xff]
    %v41 = vld [vmem:[%s1 + $0x88] sm:$0xff]
    %v42 = vld [vmem:[%s1 + $0x90] sm:$0xff]
    %v43 = vld [vmem:[%s1 + $0x98] sm:$0xff]
    %v44 = vld [vmem:[%s1 + $0xa0] sm:$0xff]
    %v45 = vld [vmem:[%s1 + $0xa8] sm:$0xff]
    %v46 = vld [vmem:[%s1 + $0xb0] sm:$0xff]
    %v47 = vld [vmem:[%s1 + $0xb8] sm:$0xff]
    %v48 = vld [vmem:[%s1 + $0xc0] sm:$0xff]
    %v49 = vld [vmem:[%s1 + $0xc8] sm:$0xff]
    %v50 = vld [vmem:[%s1 + $0xd0] sm:$0xff]
    %v51 = vld [vmem:[%s1 + $0xd8] sm:$0xff]
    %v52 = vld [vmem:[%s1 + $0xe0] sm:$0xff]
    %v53 = vld [vmem:[%s1 + $0xe8] sm:$0xff]
    %v54 = vld [vmem:[%s1 + $0xf0] sm:$0xff]
    %v55 = vld [vmem:[%s1 + $0xf8] sm:$0xff]
    %vm56 = vcmask 261120
    %v58 = vsel %vm56, %v22, 0
    %v61 = vsel %vm56, %v23, 0
    %v64 = vsel %vm56, %v24, 0
    %v67 = vsel %vm56, %v25, 0
    %v70 = vsel %vm56, %v26, 0
    %v73 = vsel %vm56, %v27, 0
    %v76 = vsel %vm56, %v28, 0
    %v79 = vsel %vm56, %v29, 0
    %v82 = vsel %vm56, %v30, 0
    %v85 = vsel %vm56, %v31, 0
    %v88 = vsel %vm56, %v32, 0
    %v91 = vsel %vm56, %v33, 0
    %v94 = vsel %vm56, %v34, 0
    %v97 = vsel %vm56, %v35, 0
    %v100 = vsel %vm56, %v36, 0
    %v103 = vsel %vm56, %v37, 0
    %v106 = vsel %vm56, %v38, 0
    %v109 = vsel %vm56, %v39, 0
    %v112 = vsel %vm56, %v40, 0
    %v115 = vsel %vm56, %v41, 0
    %v118 = vsel %vm56, %v42, 0
    %v121 = vsel %vm56, %v43, 0
    %v124 = vsel %vm56, %v44, 0
    %v127 = vsel %vm56, %v45, 0
    %v130 = vsel %vm56, %v46, 0
    %v133 = vsel %vm56, %v47, 0
    %v136 = vsel %vm56, %v48, 0
    %v139 = vsel %vm56, %v49, 0
    %v142 = vsel %vm56, %v50, 0
    %v145 = vsel %vm56, %v51, 0
    %v148 = vsel %vm56, %v52, 0
    %v151 = vsel %vm56, %v53, 0
    %v154 = vsel %vm56, %v54, 0
    %v157 = vsel %vm56, %v55, 0
    %159 = vmatprep.subr.mxu0 0.0
    %160 = vmatpush1.xpose.msra.mxu0 %v64
    %161 = vmatprep.subr.mxu0 0.0
    %162 = vmatpush1.xpose.msra.mxu0 %v67
    %163 = vmatprep.subr.mxu0 0.0
    %164 = vmatpush1.xpose.msra.mxu0 %v70
    %165 = vmatprep.subr.mxu0 0.0
    %166 = vmatpush1.xpose.msra.mxu0 %v73
    %167 = vmatprep.subr.mxu0 0.0
    %168 = vmatpush1.xpose.msra.mxu0 %v76
    %169 = vmatprep.subr.mxu0 0.0
    %170 = vmatpush1.xpose.msra.mxu0 %v79
    %171 = vmatprep.subr.mxu0 0.0
    %172 = vmatpush1.xpose.msra.mxu0 %v82
    %173 = vmatprep.subr.mxu0 0.0
    %174 = vmatpush1.xpose.msra.mxu0 %v85
    %175 = vmatprep.subr.mxu0 0.0
    %176 = vmatpush1.xpose.msra.mxu0 %v88
    %177 = vmatprep.subr.mxu0 0.0
    %178 = vmatpush1.xpose.msra.mxu0 %v91
    %179 = vmatprep.subr.mxu0 0.0
    %180 = vmatpush1.xpose.msra.mxu0 %v94
    %181 = vmatprep.subr.mxu0 0.0
    %182 = vmatpush1.xpose.msra.mxu0 %v97
    %183 = vmatprep.subr.mxu0 0.0
    %184 = vmatpush1.xpose.msra.mxu0 %v100
    %185 = vmatprep.subr.mxu0 0.0
    %186 = vmatpush1.xpose.msra.mxu0 %v103
    %187 = vmatprep.subr.mxu0 0.0
    %188 = vmatpush1.xpose.msra.mxu0 %v106
    %189 = vmatprep.subr.mxu0 0.0
    %190 = vmatpush1.xpose.msra.mxu0 %v109
    %191 = vmatprep.subr.mxu0 0.0
    %192 = vmatpush1.xpose.msra.mxu0 %v112
    %193 = vmatprep.subr.mxu0 0.0
    %194 = vmatpush1.xpose.msra.mxu0 %v115
    %195 = vmatprep.subr.mxu0 0.0
    %196 = vmatpush1.xpose.msra.mxu0 %v118
    %197 = vmatprep.subr.mxu0 0.0
    %198 = vmatpush1.xpose.msra.mxu0 %v121
    %199 = vmatprep.subr.mxu0 0.0
    %200 = vmatpush1.xpose.msra.mxu0 %v124
    %201 = vmatprep.subr.mxu0 0.0
    %202 = vmatpush1.xpose.msra.mxu0 %v127
    %203 = vmatprep.subr.mxu0 0.0
    %204 = vmatpush1.xpose.msra.mxu0 %v130
    %205 = vmatprep.subr.mxu0 0.0
    %206 = vmatpush1.xpose.msra.mxu0 %v133
    %207 = vmatprep.subr.mxu0 0.0
    %208 = vmatpush1.xpose.msra.mxu0 %v136
    %209 = vmatprep.subr.mxu0 0.0
    %210 = vmatpush1.xpose.msra.mxu0 %v139
    %211 = vmatprep.subr.mxu0 0.0
    %212 = vmatpush1.xpose.msra.mxu0 %v142
    %213 = vmatprep.subr.mxu0 0.0
    %214 = vmatpush1.xpose.msra.mxu0 %v145
    %215 = vmatprep.subr.mxu0 0.0
    %216 = vmatpush1.xpose.msra.mxu0 %v148
    %217 = vmatprep.subr.mxu0 0.0
    %218 = vmatpush1.xpose.msra.mxu0 %v151
    %219 = vmatprep.subr.mxu0 0.0
    %220 = vmatpush1.xpose.msra.mxu0 %v154
    %221 = vmatprep.subr.mxu0 0.0
    %222 = vmatpush1.xpose.msra.mxu0 %v157
    %223 = vmatprep.mubr.f32.mxu0 0.0
    %224 = vmatmul.mubr.f32.gmra.mrb[0].mxu0 %v58
    %v225 = vpop.f32.mrb[0].mxu0
    %v226 = vadd.f32 0.0, %v225
    %v227 = vpop.f32.mrb[0].mxu0
    %v228 = vadd.f32 0.0, %v227
    %229 = vmatprep.mubr.f32.mxu0 0.0
    %230 = vmatmul.mubr.f32.gmra.mrb[0].mxu0 %v61
    %v231 = vpop.f32.mrb[0].mxu0
    %v232 = vadd.f32 0.0, %v231
    %v233 = vpop.f32.mrb[0].mxu0
    %v234 = vadd.f32 0.0, %v233
    %235 = vdwg.mxu0
    %v236 = vxor.u32 %v226, 2147483648
    %v237 = vxor.u32 %v232, 2147483648
    %v238 = vmul.f32 %v236, 1.442695
    %v239 = vpow.pop %v238
    %v240 = vmul.f32 %v237, 1.442695
    %v241 = vpow.pop %v240
    %v242 = vadd.f32 %v239, 1.0
    %v243 = vadd.f32 %v241, 1.0
    %v244 = vrcp.pop %v242
    %v245 = vmul.f32 1.0, %v244
    %v246 = vrcp.pop %v243
    %v247 = vmul.f32 1.0, %v246
    %v248 = vmul.f32 %v226, %v245
    %v249 = vmul.f32 %v232, %v247
    %v250 = vmul.f32 %v248, %v228
    %v251 = vmul.f32 %v249, %v234
    %v252 = vld [vmem:[#allocation2] sm:$0xff]
    %v253 = vld [vmem:[#allocation2 + $0x8] sm:$0xff]
    %v254 = vld [vmem:[%s2] sm:$0xff]
    %v255 = vld [vmem:[%s2 + $0x8] sm:$0xff]
    %v256 = vld [vmem:[%s2 + $0x10] sm:$0xff]
    %v257 = vld [vmem:[%s2 + $0x18] sm:$0xff]
    %v258 = vld [vmem:[%s2 + $0x20] sm:$0xff]
    %v259 = vld [vmem:[%s2 + $0x28] sm:$0xff]
    %v260 = vld [vmem:[%s2 + $0x30] sm:$0xff]
    %v261 = vld [vmem:[%s2 + $0x38] sm:$0xff]
    %v262 = vld [vmem:[%s2 + $0x40] sm:$0xff]
    %v263 = vld [vmem:[%s2 + $0x48] sm:$0xff]
    %v264 = vld [vmem:[%s2 + $0x50] sm:$0xff]
    %v265 = vld [vmem:[%s2 + $0x58] sm:$0xff]
    %v266 = vld [vmem:[%s2 + $0x60] sm:$0xff]
    %v267 = vld [vmem:[%s2 + $0x68] sm:$0xff]
    %v268 = vld [vmem:[%s2 + $0x70] sm:$0xff]
    %v269 = vld [vmem:[%s2 + $0x78] sm:$0xff]
    %270 = vmatprep.subr.mxu0 0.0
    %271 = vmatpush1.msra.mxu0 %v254
    %272 = vmatprep.subr.mxu0 0.0
    %273 = vmatpush1.msra.mxu0 %v255
    %274 = vmatprep.subr.mxu0 0.0
    %275 = vmatpush1.msra.mxu0 %v256
    %276 = vmatprep.subr.mxu0 0.0
    %277 = vmatpush1.msra.mxu0 %v257
    %278 = vmatprep.subr.mxu0 0.0
    %279 = vmatpush1.msra.mxu0 %v258
    %280 = vmatprep.subr.mxu0 0.0
    %281 = vmatpush1.msra.mxu0 %v259
    %282 = vmatprep.subr.mxu0 0.0
    %283 = vmatpush1.msra.mxu0 %v260
    %284 = vmatprep.subr.mxu0 0.0
    %285 = vmatpush1.msra.mxu0 %v261
    %286 = vmatprep.subr.mxu0 0.0
    %287 = vmatpush1.msra.mxu0 %v262
    %288 = vmatprep.subr.mxu0 0.0
    %289 = vmatpush1.msra.mxu0 %v263
    %290 = vmatprep.subr.mxu0 0.0
    %291 = vmatpush1.msra.mxu0 %v264
    %292 = vmatprep.subr.mxu0 0.0
    %293 = vmatpush1.msra.mxu0 %v265
    %294 = vmatprep.subr.mxu0 0.0
    %295 = vmatpush1.msra.mxu0 %v266
    %296 = vmatprep.subr.mxu0 0.0
    %297 = vmatpush1.msra.mxu0 %v267
    %298 = vmatprep.subr.mxu0 0.0
    %299 = vmatpush1.msra.mxu0 %v268
    %300 = vmatprep.subr.mxu0 0.0
    %301 = vmatpush1.msra.mxu0 %v269
    %302 = vmatprep.subr.mxu0 0.0
    %303 = vmatpush1.msra.mxu0 0.0
    %304 = vmatprep.subr.mxu0 0.0
    %305 = vmatpush1.msra.mxu0 0.0
    %306 = vmatprep.subr.mxu0 0.0
    %307 = vmatpush1.msra.mxu0 0.0
    %308 = vmatprep.subr.mxu0 0.0
    %309 = vmatpush1.msra.mxu0 0.0
    %310 = vmatprep.subr.mxu0 0.0
    %311 = vmatpush1.msra.mxu0 0.0
    %312 = vmatprep.subr.mxu0 0.0
    %313 = vmatpush1.msra.mxu0 0.0
    %314 = vmatprep.subr.mxu0 0.0
    %315 = vmatpush1.msra.mxu0 0.0
    %316 = vmatprep.subr.mxu0 0.0
    %317 = vmatpush1.msra.mxu0 0.0
    %318 = vmatprep.subr.mxu0 0.0
    %319 = vmatpush1.msra.mxu0 0.0
    %320 = vmatprep.subr.mxu0 0.0
    %321 = vmatpush1.msra.mxu0 0.0
    %322 = vmatprep.subr.mxu0 0.0
    %323 = vmatpush1.msra.mxu0 0.0
    %324 = vmatprep.subr.mxu0 0.0
    %325 = vmatpush1.msra.mxu0 0.0
    %326 = vmatprep.subr.mxu0 0.0
    %327 = vmatpush1.msra.mxu0 0.0
    %328 = vmatprep.subr.mxu0 0.0
    %329 = vmatpush1.msra.mxu0 0.0
    %330 = vmatprep.subr.mxu0 0.0
    %331 = vmatpush1.msra.mxu0 0.0
    %332 = vmatprep.subr.mxu0 0.0
    %333 = vmatpush1.msra.mxu0 0.0
    %334 = vmatprep.mubr.f32.mxu0 0.0
    %335 = vmatmul.mubr.f32.gmra.mrb[0].mxu0 %v250
    %v336 = vpop.f32.mrb[0].mxu0
    %v337 = vadd.f32 0.0, %v336
    %v338 = vpop.f32.mrb[0].mxu0
    %339 = vmatprep.mubr.f32.mxu0 0.0
    %340 = vmatmul.mubr.f32.gmra.mrb[0].mxu0 %v251
    %v341 = vpop.f32.mrb[0].mxu0
    %v342 = vadd.f32 0.0, %v341
    %v343 = vpop.f32.mrb[0].mxu0
    %344 = vdwg.mxu0
    %v345 = vadd.f32 %v252, %v337
    %v346 = vadd.f32 %v253, %v342
    %347 = vst.msk [vmem:[#allocation2] sm:$0xff] %vm56, %v345
    %348 = vst.msk [vmem:[#allocation2 + $0x8] sm:$0xff] %vm56, %v346
    // Predicated region
    $region18: #{mlp_forward.1} parent=1 // pred_check
      %p349 = pneg %p15
    $region19: #{mlp_forward.1} parent=1 // pred_check_branch
      %351 = sbr.rel (%p349) target = $region21
    $region20: #{mlp_forward.1} parent=1 // pred_region
      %v352 = vld [vmem:[#allocation2] sm:$0xff]
      %v353 = vld [vmem:[#allocation2 + $0x8] sm:$0xff]
      %354 = vst.msk [vmem:[#allocation3] sm:$0xff] %vm56, %v352
      %355 = vst.msk [vmem:[#allocation3 + $0x8] sm:$0xff] %vm56, %v353
    $region21: #{mlp_forward.1} parent=1 // pred_fallthru
      _
    // Predicated region
    $region22: #{mlp_forward.1} parent=1 // pred_check
      _
    $region23: #{mlp_forward.1} parent=1 // pred_check_branch
      %357 = sbr.rel (0) target = $region25
    $region24: #{mlp_forward.1} parent=1 // pred_region
      %s359 = ssub.s32 256, 256
      %360 = vsyncadd [#allocation4], %s359
      %s361 = sshll.u32 [#allocation3], 4
      %s362 = int_to_ptr.vmem [resolvable:$true] %s361
      %367 = dma.vmem_to_hbm [thread:$0]  %s362, 256, %s3, [#allocation4], 128, 128, 8
    $region25: #{mlp_forward.1} parent=1 // pred_fallthru
      _
    // Predicated region
    $region26: #{mlp_forward.1} parent=1 // pred_check
      _
    $region27: #{mlp_forward.1} parent=1 // pred_check_branch
      %369 = sbr.rel (0) target = $region29
    $region28: #{mlp_forward.1} parent=1 // pred_region
      %370 = dma.done [#allocation4], 256
    $region29: #{mlp_forward.1} parent=1 // pred_fallthru
      _
    %371 = vsyncpa [#allocation4], 1

</llo_original>
